<compile_context>
chip_gen: v7x
topology: tpu7x:2x2x1
jax: 0.10.0
libtpu: 0.0.40
codegen_flags: <defaults>
</compile_context>

<pallas_src>
import functools

import jax
import jax.numpy as jnp
from jax.experimental import pallas as pl
from jax.experimental.pallas import tpu as pltpu


def _round_up(x, m):
    return ((x + m - 1) // m) * m


def _default_min_grid_steps():
    """>=2 grid steps only helps on chips with 2 TensorCores (v7x)."""
    try:
        kind = (getattr(jax.devices()[0], "device_kind", "") or "").lower()
        if "v7" in kind:
            return 2
    except Exception:
        pass
    return 1


def _vae_kernel(h_ref, eps_ref, w_enc_ref, b_enc_ref,
                w_d1_ref, b_d1_ref, w_d2_ref, b_d2_ref,
                y_ref, zmu_ref, zls_ref, *, E):
    """One batch tile of the full VAE forward pass."""
    h = h_ref[...]

    # fused encoder: z_enc = [z_mu | z_lsgms]  (one MXU matmul instead of two)
    z_enc = jnp.dot(h, w_enc_ref[...],
                    preferred_element_type=jnp.float32) + b_enc_ref[...]
    z_mu = z_enc[:, :E]
    z_ls = z_enc[:, E:]

    # reparameterization: z = eps * exp(0.5 * z_lsgms) + z_mu  (f32, EUP exp)
    z = eps_ref[...].astype(jnp.float32) * jnp.exp(z_ls * 0.5) + z_mu

    # decode_1 + ReLU
    d1 = jnp.dot(z, w_d1_ref[...],
                 preferred_element_type=jnp.float32) + b_d1_ref[...]
    d1 = jnp.maximum(d1, 0.0)

    # decode_2
    y = jnp.dot(d1, w_d2_ref[...],
                preferred_element_type=jnp.float32) + b_d2_ref[...]

    # three direct stores -- no packing/concat, no zero-pad writeback
    y_ref[...] = y.astype(y_ref.dtype)
    zmu_ref[...] = z_mu.astype(zmu_ref.dtype)
    zls_ref[...] = z_ls.astype(zls_ref.dtype)


def mlp_vae_plain_forward(h, params, eps, *, batch_tile=None,
                          min_grid_steps=None):
    """Full VAE forward in one Pallas call.

    h:      (B, h_size)
    params: dict of weights (in, out) and biases (1, out)
    eps:    (B, embedding_size)  (the torch.randn sample)
    returns (y, z_mu, z_lsgms) as float32
    """
    B, H = h.shape
    E = params["w_d1"].shape[0]
    Y = params["w_d2"].shape[1]

    # Fuse the two encoder Linears into a single (H, 2E) matmul.
    w_enc = jnp.concatenate([params["w_mu"], params["w_ls"]], axis=1)
    b_enc = jnp.concatenate([params["b_mu"], params["b_ls"]], axis=1)

    # ---- batch tiling (balanced tiles, optional megacore split) -----------
    if batch_tile is None:
        batch_tile = 2048            # overhead-bound kernel: big tiles win
    if min_grid_steps is None:
        min_grid_steps = _default_min_grid_steps()
    min_steps = min_grid_steps if B >= 16 * min_grid_steps else 1

    n_tiles = max(pl.cdiv(B, batch_tile), min_steps)
    if n_tiles == 1:
        tb, Bp = B, B
    else:
        tb = _round_up(pl.cdiv(B, n_tiles), 8)   # balanced, <8 rows pad/tile
        Bp = tb * n_tiles
    if Bp != B:
        h = jnp.pad(h, ((0, Bp - B), (0, 0)))
        eps = jnp.pad(eps, ((0, Bp - B), (0, 0)))
    grid = (n_tiles,)

    # ---- VMEM budget: 2x double-buffered activation/output tiles, weights
    # counted once (constant index_map => fetched once), + 1 MiB headroom,
    # capped at 48 MiB to stay well inside v7x's 64 MiB physical VMEM. -------
    in_tile_bytes = tb * (H * h.dtype.itemsize + E * eps.dtype.itemsize)
    out_tile_bytes = 4 * tb * (Y + 2 * E)
    weight_bytes = int(4 * (w_enc.size + b_enc.size +
                            params["w_d1"].size + params["b_d1"].size +
                            params["w_d2"].size + params["b_d2"].size))
    vmem_limit = int(min(48 * 2**20,
                         max(4 * 2**20,
                             2 * (in_tile_bytes + out_tile_bytes)
                             + weight_bytes + (1 << 20))))

    cost = pl.CostEstimate(
        flops=2 * Bp * (H * 2 * E + E * E + E * Y),
        transcendentals=Bp * E,
        bytes_accessed=int(Bp * (H * h.dtype.itemsize + E * eps.dtype.itemsize)
                           + 4 * Bp * (Y + 2 * E) + weight_bytes),
    )

    kernel = functools.partial(_vae_kernel, E=E)
    batch_map = lambda i: (i, 0)
    const_map = lambda i: (0, 0)

    y, z_mu, z_ls = pl.pallas_call(
        kernel,
        out_shape=(jax.ShapeDtypeStruct((Bp, Y), jnp.float32),
                   jax.ShapeDtypeStruct((Bp, E), jnp.float32),
                   jax.ShapeDtypeStruct((Bp, E), jnp.float32)),
        grid=grid,
        in_specs=[
            pl.BlockSpec((tb, H), batch_map),              # h tile
            pl.BlockSpec((tb, E), batch_map),              # eps tile
            pl.BlockSpec(tuple(w_enc.shape), const_map),   # resident weights
            pl.BlockSpec(tuple(b_enc.shape), const_map),
            pl.BlockSpec(tuple(params["w_d1"].shape), const_map),
            pl.BlockSpec(tuple(params["b_d1"].shape), const_map),
            pl.BlockSpec(tuple(params["w_d2"].shape), const_map),
            pl.BlockSpec(tuple(params["b_d2"].shape), const_map),
        ],
        out_specs=(pl.BlockSpec((tb, Y), batch_map),
                   pl.BlockSpec((tb, E), batch_map),
                   pl.BlockSpec((tb, E), batch_map)),
        compiler_params=pltpu.CompilerParams(
            dimension_semantics=("parallel",),
            vmem_limit_bytes=vmem_limit,
        ),
        cost_estimate=cost,
    )(h, eps, w_enc, b_enc,
      params["w_d1"], params["b_d1"], params["w_d2"], params["b_d2"])

    if Bp != B:          # cheap row slice only when padding was needed
        y, z_mu, z_ls = y[:B], z_mu[:B], z_ls[:B]
    return y, z_mu, z_ls


def init_params(key, h_size, embedding_size, y_size):
    """Mirrors the module's __init__: xavier_uniform(gain=sqrt(2)) weights,
    PyTorch-default uniform(-1/sqrt(fan_in), 1/sqrt(fan_in)) biases."""
    gain = jnp.sqrt(2.0)

    def xavier(key, fan_in, fan_out):
        bound = gain * jnp.sqrt(6.0 / (fan_in + fan_out))
        # stored as (in, out) so kernel does h @ W
        return jax.random.uniform(key, (fan_in, fan_out), jnp.float32,
                                  minval=-bound, maxval=bound)

    def bias(key, fan_in, fan_out):
        bound = 1.0 / jnp.sqrt(fan_in)
        return jax.random.uniform(key, (1, fan_out), jnp.float32,
                                  minval=-bound, maxval=bound)

    ks = jax.random.split(key, 8)
    return {
        "w_mu": xavier(ks[0], h_size, embedding_size),
        "b_mu": bias(ks[1], h_size, embedding_size),
        "w_ls": xavier(ks[2], h_size, embedding_size),
        "b_ls": bias(ks[3], h_size, embedding_size),
        "w_d1": xavier(ks[4], embedding_size, embedding_size),
        "b_d1": bias(ks[5], embedding_size, embedding_size),
        "w_d2": xavier(ks[6], embedding_size, y_size),
        "b_d2": bias(ks[7], embedding_size, y_size),
    }


def reference_forward(h, params, eps):
    """Pure-JAX reference for correctness checking."""
    z_mu = h @ params["w_mu"] + params["b_mu"]
    z_ls = h @ params["w_ls"] + params["b_ls"]
    z = eps * jnp.exp(0.5 * z_ls) + z_mu
    y = jnp.maximum(z @ params["w_d1"] + params["b_d1"], 0.0)
    y = y @ params["w_d2"] + params["b_d2"]
    return y, z_mu, z_ls


if __name__ == "__main__":
    H_SIZE, EMB, Y_SIZE = 32, 16, 24

    key = jax.random.PRNGKey(0)
    k_param, k_h, k_eps, k_h2, k_eps2 = jax.random.split(key, 5)
    params = init_params(k_param, H_SIZE, EMB, Y_SIZE)

    # --- small batch: single grid step (or 2 on v7x — both paths correct) ---
    B = 8
    h = jax.random.normal(k_h, (B, H_SIZE), jnp.float32)
    eps = jax.random.normal(k_eps, (B, EMB), jnp.float32)  # torch.randn sample

    y, z_mu, z_lsgms = jax.block_until_ready(
        mlp_vae_plain_forward(h, params, eps))

    y_ref, zmu_ref, zls_ref = reference_forward(h, params, eps)
    assert jnp.allclose(y, y_ref, atol=1e-5, rtol=1e-5)
    assert jnp.allclose(z_mu, zmu_ref, atol=1e-5, rtol=1e-5)
    assert jnp.allclose(z_lsgms, zls_ref, atol=1e-5, rtol=1e-5)

    # --- larger, non-divisible batch: exercises balanced tiles + row padding -
    B2 = 300
    h2 = jax.random.normal(k_h2, (B2, H_SIZE), jnp.float32)
    eps2 = jax.random.normal(k_eps2, (B2, EMB), jnp.float32)

    y2, zmu2, zls2 = jax.block_until_ready(
        mlp_vae_plain_forward(h2, params, eps2, batch_tile=128))

    y2_ref, zmu2_ref, zls2_ref = reference_forward(h2, params, eps2)
    assert jnp.allclose(y2, y2_ref, atol=1e-5, rtol=1e-5)
    assert jnp.allclose(zmu2, zmu2_ref, atol=1e-5, rtol=1e-5)
    assert jnp.allclose(zls2, zls2_ref, atol=1e-5, rtol=1e-5)

    # --- default (large) tile path, forced 2-step grid (megacore split) -----
    B3 = 200
    h3 = jax.random.normal(k_h, (B3, H_SIZE), jnp.float32)
    eps3 = jax.random.normal(k_eps, (B3, EMB), jnp.float32)
    y3, zmu3, zls3 = jax.block_until_ready(
        mlp_vae_plain_forward(h3, params, eps3, min_grid_steps=2))
    y3_ref, zmu3_ref, zls3_ref = reference_forward(h3, params, eps3)
    assert jnp.allclose(y3, y3_ref, atol=1e-5, rtol=1e-5)
    assert jnp.allclose(zmu3, zmu3_ref, atol=1e-5, rtol=1e-5)
    assert jnp.allclose(zls3, zls3_ref, atol=1e-5, rtol=1e-5)

    print("KERNEL_OK")
</pallas_src>

<mosaic_0001>
module attributes {stable_mosaic.version = 11 : i64} {
  func.func @_vae_kernel(%arg0: i32, %arg1: memref<8x32xf32, #tpu.memory_space<vmem>>, %arg2: memref<8x16xf32, #tpu.memory_space<vmem>>, %arg3: memref<32x32xf32, #tpu.memory_space<vmem>>, %arg4: memref<1x32xf32, #tpu.memory_space<vmem>>, %arg5: memref<16x16xf32, #tpu.memory_space<vmem>>, %arg6: memref<1x16xf32, #tpu.memory_space<vmem>>, %arg7: memref<16x24xf32, #tpu.memory_space<vmem>>, %arg8: memref<1x24xf32, #tpu.memory_space<vmem>>, %arg9: memref<8x24xf32, #tpu.memory_space<vmem>>, %arg10: memref<8x16xf32, #tpu.memory_space<vmem>>, %arg11: memref<8x16xf32, #tpu.memory_space<vmem>>) attributes {dimension_semantics = [#tpu.dimension_semantics<parallel>], iteration_bounds = array<i64: 1>, scalar_prefetch = 0 : i64, scratch_operands = 0 : i64, tpu.core_type = #tpu.core_type<tc>, window_params = [{transform_indices = @transform_0, window_bounds = array<i64: 8, 32>}, {transform_indices = @transform_1, window_bounds = array<i64: 8, 16>}, {pipeline_mode = #tpu.pipeline_mode<synchronous>, transform_indices = @transform_2, window_bounds = array<i64: 32, 32>}, {pipeline_mode = #tpu.pipeline_mode<synchronous>, transform_indices = @transform_3, window_bounds = array<i64: 1, 32>}, {pipeline_mode = #tpu.pipeline_mode<synchronous>, transform_indices = @transform_4, window_bounds = array<i64: 16, 16>}, {pipeline_mode = #tpu.pipeline_mode<synchronous>, transform_indices = @transform_5, window_bounds = array<i64: 1, 16>}, {pipeline_mode = #tpu.pipeline_mode<synchronous>, transform_indices = @transform_6, window_bounds = array<i64: 16, 24>}, {pipeline_mode = #tpu.pipeline_mode<synchronous>, transform_indices = @transform_7, window_bounds = array<i64: 1, 24>}, {transform_indices = @transform_8, window_bounds = array<i64: 8, 24>}, {transform_indices = @transform_9, window_bounds = array<i64: 8, 16>}, {transform_indices = @transform_10, window_bounds = array<i64: 8, 16>}]} {
    %c0 = arith.constant 0 : index
    %c0_0 = arith.constant 0 : index
    %0 = vector.load %arg1[%c0, %c0_0] : memref<8x32xf32, #tpu.memory_space<vmem>>, vector<8x32xf32>
    %c0_1 = arith.constant 0 : index
    %c0_2 = arith.constant 0 : index
    %1 = vector.load %arg3[%c0_1, %c0_2] : memref<32x32xf32, #tpu.memory_space<vmem>>, vector<32x32xf32>
    %cst = arith.constant dense<0.000000e+00> : vector<8x32xf32>
    %2 = tpu.matmul %0, %1, %cst {dimension_numbers = #tpu.dot_dimension_numbers<[1], [0], [0], [1], [0, 0, 1, 1], [], []>} : vector<8x32xf32>, vector<32x32xf32>, vector<8x32xf32> -> vector<8x32xf32>
    %c0_3 = arith.constant 0 : index
    %c0_4 = arith.constant 0 : index
    %3 = vector.load %arg4[%c0_3, %c0_4] : memref<1x32xf32, #tpu.memory_space<vmem>>, vector<1x32xf32>
    %4 = vector.broadcast %3 : vector<1x32xf32> to vector<8x32xf32>
    %5 = arith.addf %2, %4 : vector<8x32xf32>
    %6 = vector.extract_strided_slice %5 {offsets = [0, 0], sizes = [8, 16], strides = [1, 1]} : vector<8x32xf32> to vector<8x16xf32>
    %7 = vector.extract_strided_slice %5 {offsets = [0, 16], sizes = [8, 16], strides = [1, 1]} : vector<8x32xf32> to vector<8x16xf32>
    %c0_5 = arith.constant 0 : index
    %c0_6 = arith.constant 0 : index
    %8 = vector.load %arg2[%c0_5, %c0_6] : memref<8x16xf32, #tpu.memory_space<vmem>>, vector<8x16xf32>
    %cst_7 = arith.constant 5.000000e-01 : f32
    %9 = vector.broadcast %cst_7 : f32 to vector<8x16xf32>
    %10 = arith.mulf %7, %9 : vector<8x16xf32>
    %11 = math.exp %10 : vector<8x16xf32>
    %12 = arith.mulf %8, %11 : vector<8x16xf32>
    %13 = arith.addf %12, %6 : vector<8x16xf32>
    %c0_8 = arith.constant 0 : index
    %c0_9 = arith.constant 0 : index
    %14 = vector.load %arg5[%c0_8, %c0_9] : memref<16x16xf32, #tpu.memory_space<vmem>>, vector<16x16xf32>
    %cst_10 = arith.constant dense<0.000000e+00> : vector<8x16xf32>
    %15 = tpu.matmul %13, %14, %cst_10 {dimension_numbers = #tpu.dot_dimension_numbers<[1], [0], [0], [1], [0, 0, 1, 1], [], []>} : vector<8x16xf32>, vector<16x16xf32>, vector<8x16xf32> -> vector<8x16xf32>
    %c0_11 = arith.constant 0 : index
    %c0_12 = arith.constant 0 : index
    %16 = vector.load %arg6[%c0_11, %c0_12] : memref<1x16xf32, #tpu.memory_space<vmem>>, vector<1x16xf32>
    %17 = vector.broadcast %16 : vector<1x16xf32> to vector<8x16xf32>
    %18 = arith.addf %15, %17 : vector<8x16xf32>
    %cst_13 = arith.constant 0.000000e+00 : f32
    %19 = vector.broadcast %cst_13 : f32 to vector<8x16xf32>
    %20 = arith.maximumf %18, %19 : vector<8x16xf32>
    %c0_14 = arith.constant 0 : index
    %c0_15 = arith.constant 0 : index
    %21 = vector.load %arg7[%c0_14, %c0_15] : memref<16x24xf32, #tpu.memory_space<vmem>>, vector<16x24xf32>
    %cst_16 = arith.constant dense<0.000000e+00> : vector<8x24xf32>
    %22 = tpu.matmul %20, %21, %cst_16 {dimension_numbers = #tpu.dot_dimension_numbers<[1], [0], [0], [1], [0, 0, 1, 1], [], []>} : vector<8x16xf32>, vector<16x24xf32>, vector<8x24xf32> -> vector<8x24xf32>
    %c0_17 = arith.constant 0 : index
    %c0_18 = arith.constant 0 : index
    %23 = vector.load %arg8[%c0_17, %c0_18] : memref<1x24xf32, #tpu.memory_space<vmem>>, vector<1x24xf32>
    %24 = vector.broadcast %23 : vector<1x24xf32> to vector<8x24xf32>
    %25 = arith.addf %22, %24 : vector<8x24xf32>
    %c0_19 = arith.constant 0 : index
    %c0_20 = arith.constant 0 : index
    %26 = vector.load %arg9[%c0_19, %c0_20] : memref<8x24xf32, #tpu.memory_space<vmem>>, vector<8x24xf32>
    tpu.vector_store %arg9[%c0_19, %c0_20], %25 {strides = array<i32>} : memref<8x24xf32, #tpu.memory_space<vmem>>, vector<8x24xf32>,
    %c0_21 = arith.constant 0 : index
    %c0_22 = arith.constant 0 : index
    %27 = vector.load %arg10[%c0_21, %c0_22] : memref<8x16xf32, #tpu.memory_space<vmem>>, vector<8x16xf32>
    tpu.vector_store %arg10[%c0_21, %c0_22], %6 {strides = array<i32>} : memref<8x16xf32, #tpu.memory_space<vmem>>, vector<8x16xf32>,
    %c0_23 = arith.constant 0 : index
    %c0_24 = arith.constant 0 : index
    %28 = vector.load %arg11[%c0_23, %c0_24] : memref<8x16xf32, #tpu.memory_space<vmem>>, vector<8x16xf32>
    tpu.vector_store %arg11[%c0_23, %c0_24], %7 {strides = array<i32>} : memref<8x16xf32, #tpu.memory_space<vmem>>, vector<8x16xf32>,
    return
  }
  func.func @transform_0(%arg0: i32) -> (i32, i32) {
    %c0_i32 = arith.constant 0 : i32
    %c0_i32_0 = arith.constant 0 : i32
    return %arg0, %c0_i32 : i32, i32
  }
  func.func @transform_1(%arg0: i32) -> (i32, i32) {
    %c0_i32 = arith.constant 0 : i32
    %c0_i32_0 = arith.constant 0 : i32
    return %arg0, %c0_i32 : i32, i32
  }
  func.func @transform_2(%arg0: i32) -> (i32, i32) {
    %c0_i32 = arith.constant 0 : i32
    %c0_i32_0 = arith.constant 0 : i32
    %c0_i32_1 = arith.constant 0 : i32
    return %c0_i32, %c0_i32_0 : i32, i32
  }
  func.func @transform_3(%arg0: i32) -> (i32, i32) {
    %c0_i32 = arith.constant 0 : i32
    %c0_i32_0 = arith.constant 0 : i32
    %c0_i32_1 = arith.constant 0 : i32
    return %c0_i32, %c0_i32_0 : i32, i32
  }
  func.func @transform_4(%arg0: i32) -> (i32, i32) {
    %c0_i32 = arith.constant 0 : i32
    %c0_i32_0 = arith.constant 0 : i32
    %c0_i32_1 = arith.constant 0 : i32
    return %c0_i32, %c0_i32_0 : i32, i32
  }
  func.func @transform_5(%arg0: i32) -> (i32, i32) {
    %c0_i32 = arith.constant 0 : i32
    %c0_i32_0 = arith.constant 0 : i32
    %c0_i32_1 = arith.constant 0 : i32
    return %c0_i32, %c0_i32_0 : i32, i32
  }
  func.func @transform_6(%arg0: i32) -> (i32, i32) {
    %c0_i32 = arith.constant 0 : i32
    %c0_i32_0 = arith.constant 0 : i32
    %c0_i32_1 = arith.constant 0 : i32
    return %c0_i32, %c0_i32_0 : i32, i32
  }
  func.func @transform_7(%arg0: i32) -> (i32, i32) {
    %c0_i32 = arith.constant 0 : i32
    %c0_i32_0 = arith.constant 0 : i32
    %c0_i32_1 = arith.constant 0 : i32
    return %c0_i32, %c0_i32_0 : i32, i32
  }
  func.func @transform_8(%arg0: i32) -> (i32, i32) {
    %c0_i32 = arith.constant 0 : i32
    %c0_i32_0 = arith.constant 0 : i32
    return %arg0, %c0_i32 : i32, i32
  }
  func.func @transform_9(%arg0: i32) -> (i32, i32) {
    %c0_i32 = arith.constant 0 : i32
    %c0_i32_0 = arith.constant 0 : i32
    return %arg0, %c0_i32 : i32, i32
  }
  func.func @transform_10(%arg0: i32) -> (i32, i32) {
    %c0_i32 = arith.constant 0 : i32
    %c0_i32_0 = arith.constant 0 : i32
    return %arg0, %c0_i32 : i32, i32
  }
}

</mosaic_0001>

<llo_original>
// kernel: tpu_custom_call.1
$region0: #{tpu_custom_call.1}
  #allocation0 [shape = 'u32[]', space=smem, size = 0x4, offset = 0x4, fixed_abs, tag = 'smem constant byte address 0x4 - core index']
  #allocation1 [shape = 'u32[144,128]{1,0:T(1,128)}', space=vmem, size = 0x12000, scoped, tag = 'internal scratch']
  %s0 = inlined_call_operand.hbm [shape: f32[8,32], index: 0, kind: input, shape index: {}]
  %s1 = inlined_call_operand.hbm [shape: f32[8,16], index: 1, kind: input, shape index: {}]
  %s2 = inlined_call_operand.hbm [shape: f32[32,32], index: 2, kind: input, shape index: {}]
  %s3 = inlined_call_operand.vmem [shape: f32[1,32], index: 3, kind: input, shape index: {}]
  %s4 = inlined_call_operand.hbm [shape: f32[16,16], index: 4, kind: input, shape index: {}]
  %s5 = inlined_call_operand.vmem [shape: f32[1,16], index: 5, kind: input, shape index: {}]
  %s6 = inlined_call_operand.vmem [shape: f32[16,24], index: 6, kind: input, shape index: {}]
  %s7 = inlined_call_operand.vmem [shape: f32[1,24], index: 7, kind: input, shape index: {}]
  %s8 = inlined_call_operand.hbm [shape: f32[8,24], index: 8, kind: output, shape index: {0}]
  %s9 = inlined_call_operand.hbm [shape: f32[8,16], index: 9, kind: output, shape index: {1}]
  %s10 = inlined_call_operand.hbm [shape: f32[8,16], index: 10, kind: output, shape index: {2}]
  %11 = xla_tuple %s8, %s9, %s10
  %s12 = sld [smem:[#allocation0]]
  $region74: #{tpu_custom_call.1} parent=0
    _
  %s14 = ssub.s32 1, %s12
  %s15 = scalar_select 0, %s14, %s12
  $region1: #{tpu_custom_call.1} parent=0
    #allocation2 [shape = 'u8[4096]{0}', space=vmem, size = 0x1000, scoped, tag = 'input window, operand 0, single buffered']
    #allocation3 [shape = 's32[1]{0}', space=sflag, size = 0x4, scoped, tag = 'scoped memory for tpu_custom_call.1']
    #allocation4 [shape = 's32[1]{0}', space=sflag, size = 0x4, scoped, tag = 'scoped memory for tpu_custom_call.1']
    #allocation5 [shape = 'u8[4096]{0}', space=vmem, size = 0x1000, scoped, tag = 'input window, operand 1, single buffered']
    #allocation6 [shape = 's32[1]{0}', space=sflag, size = 0x4, scoped, tag = 'scoped memory for tpu_custom_call.1']
    #allocation7 [shape = 'u8[16384]{0}', space=vmem, size = 0x4000, scoped, tag = 'input window, operand 2, single buffered']
    #allocation8 [shape = 'u8[8192]{0}', space=vmem, size = 0x2000, scoped, tag = 'input window, operand 4, single buffered']
    #allocation9 [shape = 's32[1]{0}', space=sflag, size = 0x4, scoped, tag = 'scoped memory for tpu_custom_call.1']
    #allocation10 [shape = 'u8[4096]{0}', space=vmem, size = 0x1000, scoped, tag = 'output window, operand 0, single buffered']
    #allocation11 [shape = 'u8[4096]{0}', space=vmem, size = 0x1000, scoped, tag = 'output window, operand 1, single buffered']
    #allocation12 [shape = 's32[1]{0}', space=sflag, size = 0x4, scoped, tag = 'scoped memory for tpu_custom_call.1']
    #allocation13 [shape = 'u8[4096]{0}', space=vmem, size = 0x1000, scoped, tag = 'output window, operand 2, single buffered']
    %16 = vsyncpa [#allocation3], 0
    %17 = vsyncpa [#allocation6], 0
    %18 = vsyncpa [#allocation9], 0
    %19 = vsyncpa [#allocation4], 0
    %20 = vsyncpa [#allocation12], 0
    // Predicated region
    $region2: #{tpu_custom_call.1} parent=1 // pred_check
      _
    $region3: #{tpu_custom_call.1} parent=1 // pred_check_branch
      %22 = sbr.rel (0) target = $region5
    $region4: #{tpu_custom_call.1} parent=1 // pred_region
      %s24 = ssub.s32 128, 128
      %25 = vsyncadd [#allocation3], %s24
      %s27 = sshll.u32 [#allocation2], 4
      %s28 = int_to_ptr.vmem [resolvable:$true] %s27
      %30 = dma.hbm_to_vmem [thread:$0]  %s0, 128, %s28, [#allocation3]
    $region5: #{tpu_custom_call.1} parent=1 // pred_fallthru
      _
    // Predicated region
    $region6: #{tpu_custom_call.1} parent=1 // pred_check
      _
    $region7: #{tpu_custom_call.1} parent=1 // pred_check_branch
      %32 = sbr.rel (0) target = $region9
    $region8: #{tpu_custom_call.1} parent=1 // pred_region
      %s34 = ssub.s32 128, 128
      %35 = vsyncadd [#allocation6], %s34
      %s37 = sshll.u32 [#allocation5], 4
      %s38 = int_to_ptr.vmem [resolvable:$true] %s37
      %40 = dma.hbm_to_vmem [thread:$0]  %s1, 128, %s38, [#allocation6]
    $region9: #{tpu_custom_call.1} parent=1 // pred_fallthru
      _
    // Predicated region
    $region10: #{tpu_custom_call.1} parent=1 // pred_check
      _
    $region11: #{tpu_custom_call.1} parent=1 // pred_check_branch
      %42 = sbr.rel (0) target = $region13
    $region12: #{tpu_custom_call.1} parent=1 // pred_region
      %s44 = ssub.s32 512, 512
      %45 = vsyncadd [#allocation6], %s44
      %s46 = sshll.u32 [#allocation7], 4
      %s47 = int_to_ptr.vmem [resolvable:$true] %s46
      %52 = dma.hbm_to_vmem [thread:$0]  %s2, 512, %s47, [#allocation6], 128, 128, 8
    $region13: #{tpu_custom_call.1} parent=1 // pred_fallthru
      _
    // Predicated region
    $region14: #{tpu_custom_call.1} parent=1 // pred_check
      _
    $region15: #{tpu_custom_call.1} parent=1 // pred_check_branch
      %54 = sbr.rel (0) target = $region17
    $region16: #{tpu_custom_call.1} parent=1 // pred_region
      _
    $region17: #{tpu_custom_call.1} parent=1 // pred_fallthru
      _
    // Predicated region
    $region18: #{tpu_custom_call.1} parent=1 // pred_check
      _
    $region19: #{tpu_custom_call.1} parent=1 // pred_check_branch
      %56 = sbr.rel (0) target = $region21
    $region20: #{tpu_custom_call.1} parent=1 // pred_region
      %s58 = ssub.s32 256, 256
      %59 = vsyncadd [#allocation9], %s58
      %s60 = sshll.u32 [#allocation8], 4
      %s61 = int_to_ptr.vmem [resolvable:$true] %s60
      %66 = dma.hbm_to_vmem [thread:$0]  %s4, 256, %s61, [#allocation9], 128, 128, 8
    $region21: #{tpu_custom_call.1} parent=1 // pred_fallthru
      _
    // Predicated region
    $region22: #{tpu_custom_call.1} parent=1 // pred_check
      _
    $region23: #{tpu_custom_call.1} parent=1 // pred_check_branch
      %68 = sbr.rel (0) target = $region25
    $region24: #{tpu_custom_call.1} parent=1 // pred_region
      _
    $region25: #{tpu_custom_call.1} parent=1 // pred_fallthru
      _
    // Predicated region
    $region26: #{tpu_custom_call.1} parent=1 // pred_check
      _
    $region27: #{tpu_custom_call.1} parent=1 // pred_check_branch
      %70 = sbr.rel (0) target = $region29
    $region28: #{tpu_custom_call.1} parent=1 // pred_region
      _
    $region29: #{tpu_custom_call.1} parent=1 // pred_fallthru
      _
    // Predicated region
    $region30: #{tpu_custom_call.1} parent=1 // pred_check
      _
    $region31: #{tpu_custom_call.1} parent=1 // pred_check_branch
      %72 = sbr.rel (0) target = $region33
    $region32: #{tpu_custom_call.1} parent=1 // pred_region
      _
    $region33: #{tpu_custom_call.1} parent=1 // pred_fallthru
      _
    // Predicated region
    $region34: #{tpu_custom_call.1} parent=1 // pred_check
      _
    $region35: #{tpu_custom_call.1} parent=1 // pred_check_branch
      %74 = sbr.rel (0) target = $region37
    $region36: #{tpu_custom_call.1} parent=1 // pred_region
      %75 = dma.done [#allocation3], 128
    $region37: #{tpu_custom_call.1} parent=1 // pred_fallthru
      _
    // Predicated region
    $region38: #{tpu_custom_call.1} parent=1 // pred_check
      _
    $region39: #{tpu_custom_call.1} parent=1 // pred_check_branch
      %77 = sbr.rel (0) target = $region41
    $region40: #{tpu_custom_call.1} parent=1 // pred_region
      %78 = dma.done [#allocation6], 128
    $region41: #{tpu_custom_call.1} parent=1 // pred_fallthru
      _
    // Predicated region
    $region42: #{tpu_custom_call.1} parent=1 // pred_check
      _
    $region43: #{tpu_custom_call.1} parent=1 // pred_check_branch
      %80 = sbr.rel (0) target = $region45
    $region44: #{tpu_custom_call.1} parent=1 // pred_region
      %81 = dma.done [#allocation6], 512
    $region45: #{tpu_custom_call.1} parent=1 // pred_fallthru
      _
    // Predicated region
    $region46: #{tpu_custom_call.1} parent=1 // pred_check
      _
    $region47: #{tpu_custom_call.1} parent=1 // pred_check_branch
      %83 = sbr.rel (0) target = $region49
    $region48: #{tpu_custom_call.1} parent=1 // pred_region
      %84 = dma.done [#allocation9], 256
    $region49: #{tpu_custom_call.1} parent=1 // pred_fallthru
      _
    %v85 = vld [vmem:[#allocation2] sm:$0xff]
    %v86 = vld [vmem:[#allocation7] sm:$0xff]
    %v87 = vld [vmem:[#allocation7 + $0x8] sm:$0xff]
    %v88 = vld [vmem:[#allocation7 + $0x10] sm:$0xff]
    %v89 = vld [vmem:[#allocation7 + $0x18] sm:$0xff]
    %v90 = vld [vmem:[%s3] sm:$0x1]
    %v92 = vlaneseq
    %v93 = vshrl.u32 %v92, 7
    %v94 = vsub.s32 0, %v93
    %v95 = vrot.slane %v90, %v94
    %vm97 = vcmask 261120
    %v99 = vsel %vm97, %v85, 0
    %101 = vmatprep.subr.mxu0 0.0
    %102 = vmatpush1.msra.mxu0 %v86
    %103 = vmatprep.subr.mxu0 0.0
    %104 = vmatpush1.msra.mxu0 %v87
    %105 = vmatprep.subr.mxu0 0.0
    %106 = vmatpush1.msra.mxu0 %v88
    %107 = vmatprep.subr.mxu0 0.0
    %108 = vmatpush1.msra.mxu0 %v89
    %109 = vmatprep.subr.mxu0 0.0
    %110 = vmatpush1.msra.mxu0 0.0
    %111 = vmatprep.subr.mxu0 0.0
    %112 = vmatpush1.msra.mxu0 0.0
    %113 = vmatprep.subr.mxu0 0.0
    %114 = vmatpush1.msra.mxu0 0.0
    %115 = vmatprep.subr.mxu0 0.0
    %116 = vmatpush1.msra.mxu0 0.0
    %117 = vmatprep.subr.mxu0 0.0
    %118 = vmatpush1.msra.mxu0 0.0
    %119 = vmatprep.subr.mxu0 0.0
    %120 = vmatpush1.msra.mxu0 0.0
    %121 = vmatprep.subr.mxu0 0.0
    %122 = vmatpush1.msra.mxu0 0.0
    %123 = vmatprep.subr.mxu0 0.0
    %124 = vmatpush1.msra.mxu0 0.0
    %125 = vmatprep.subr.mxu0 0.0
    %126 = vmatpush1.msra.mxu0 0.0
    %127 = vmatprep.subr.mxu0 0.0
    %128 = vmatpush1.msra.mxu0 0.0
    %129 = vmatprep.subr.mxu0 0.0
    %130 = vmatpush1.msra.mxu0 0.0
    %131 = vmatprep.subr.mxu0 0.0
    %132 = vmatpush1.msra.mxu0 0.0
    %133 = vmatprep.subr.mxu0 0.0
    %134 = vmatpush1.msra.mxu0 0.0
    %135 = vmatprep.subr.mxu0 0.0
    %136 = vmatpush1.msra.mxu0 0.0
    %137 = vmatprep.subr.mxu0 0.0
    %138 = vmatpush1.msra.mxu0 0.0
    %139 = vmatprep.subr.mxu0 0.0
    %140 = vmatpush1.msra.mxu0 0.0
    %141 = vmatprep.subr.mxu0 0.0
    %142 = vmatpush1.msra.mxu0 0.0
    %143 = vmatprep.subr.mxu0 0.0
    %144 = vmatpush1.msra.mxu0 0.0
    %145 = vmatprep.subr.mxu0 0.0
    %146 = vmatpush1.msra.mxu0 0.0
    %147 = vmatprep.subr.mxu0 0.0
    %148 = vmatpush1.msra.mxu0 0.0
    %149 = vmatprep.subr.mxu0 0.0
    %150 = vmatpush1.msra.mxu0 0.0
    %151 = vmatprep.subr.mxu0 0.0
    %152 = vmatpush1.msra.mxu0 0.0
    %153 = vmatprep.subr.mxu0 0.0
    %154 = vmatpush1.msra.mxu0 0.0
    %155 = vmatprep.subr.mxu0 0.0
    %156 = vmatpush1.msra.mxu0 0.0
    %157 = vmatprep.subr.mxu0 0.0
    %158 = vmatpush1.msra.mxu0 0.0
    %159 = vmatprep.subr.mxu0 0.0
    %160 = vmatpush1.msra.mxu0 0.0
    %161 = vmatprep.subr.mxu0 0.0
    %162 = vmatpush1.msra.mxu0 0.0
    %163 = vmatprep.subr.mxu0 0.0
    %164 = vmatpush1.msra.mxu0 0.0
    %165 = vmatprep.mubr.f32.mxu0 0.0
    %166 = vmatmul.mubr.f32.gmra.mrb[0].mxu0 %v99
    %v167 = vpop.f32.mrb[0].mxu0
    %v168 = vadd.f32 %v95, %v167
    %v169 = vpop.f32.mrb[0].mxu0
    %170 = vdwg.mxu0
    %v171 = vld [vmem:[#allocation5] sm:$0xff]
    %v172 = vmul.f32 %v168, 0.5
    %v173 = vmul.f32 %v172, 1.442695
    %v174 = vpow.pop %v173
    %176 = vrot.lane.b32.xlu0 %v174, 112
    %v177 = vpop.permute.xlu0 %176
    %v179 = vmul.f32 %v171, %v177
    %v180 = vadd.f32 %v179, %v168
    %v181 = vld [vmem:[#allocation8] sm:$0xff]
    %v182 = vld [vmem:[#allocation8 + $0x8] sm:$0xff]
    %v183 = vld [vmem:[%s5] sm:$0x1]
    %v185 = vlaneseq
    %v186 = vshrl.u32 %v185, 7
    %v187 = vsub.s32 0, %v186
    %v188 = vrot.slane %v183, %v187
    %vm190 = vcmask 130048
    %v192 = vsel %vm190, %v180, 0
    %194 = vmatprep.subr.mxu0 0.0
    %195 = vmatpush1.msra.mxu0 %v181
    %196 = vmatprep.subr.mxu0 0.0
    %197 = vmatpush1.msra.mxu0 %v182
    %198 = vmatprep.subr.mxu0 0.0
    %199 = vmatpush1.msra.mxu0 0.0
    %200 = vmatprep.subr.mxu0 0.0
    %201 = vmatpush1.msra.mxu0 0.0
    %202 = vmatprep.subr.mxu0 0.0
    %203 = vmatpush1.msra.mxu0 0.0
    %204 = vmatprep.subr.mxu0 0.0
    %205 = vmatpush1.msra.mxu0 0.0
    %206 = vmatprep.subr.mxu0 0.0
    %207 = vmatpush1.msra.mxu0 0.0
    %208 = vmatprep.subr.mxu0 0.0
    %209 = vmatpush1.msra.mxu0 0.0
    %210 = vmatprep.subr.mxu0 0.0
    %211 = vmatpush1.msra.mxu0 0.0
    %212 = vmatprep.subr.mxu0 0.0
    %213 = vmatpush1.msra.mxu0 0.0
    %214 = vmatprep.subr.mxu0 0.0
    %215 = vmatpush1.msra.mxu0 0.0
    %216 = vmatprep.subr.mxu0 0.0
    %217 = vmatpush1.msra.mxu0 0.0
    %218 = vmatprep.subr.mxu0 0.0
    %219 = vmatpush1.msra.mxu0 0.0
    %220 = vmatprep.subr.mxu0 0.0
    %221 = vmatpush1.msra.mxu0 0.0
    %222 = vmatprep.subr.mxu0 0.0
    %223 = vmatpush1.msra.mxu0 0.0
    %224 = vmatprep.subr.mxu0 0.0
    %225 = vmatpush1.msra.mxu0 0.0
    %226 = vmatprep.subr.mxu0 0.0
    %227 = vmatpush1.msra.mxu0 0.0
    %228 = vmatprep.subr.mxu0 0.0
    %229 = vmatpush1.msra.mxu0 0.0
    %230 = vmatprep.subr.mxu0 0.0
    %231 = vmatpush1.msra.mxu0 0.0
    %232 = vmatprep.subr.mxu0 0.0
    %233 = vmatpush1.msra.mxu0 0.0
    %234 = vmatprep.subr.mxu0 0.0
    %235 = vmatpush1.msra.mxu0 0.0
    %236 = vmatprep.subr.mxu0 0.0
    %237 = vmatpush1.msra.mxu0 0.0
    %238 = vmatprep.subr.mxu0 0.0
    %239 = vmatpush1.msra.mxu0 0.0
    %240 = vmatprep.subr.mxu0 0.0
    %241 = vmatpush1.msra.mxu0 0.0
    %242 = vmatprep.subr.mxu0 0.0
    %243 = vmatpush1.msra.mxu0 0.0
    %244 = vmatprep.subr.mxu0 0.0
    %245 = vmatpush1.msra.mxu0 0.0
    %246 = vmatprep.subr.mxu0 0.0
    %247 = vmatpush1.msra.mxu0 0.0
    %248 = vmatprep.subr.mxu0 0.0
    %249 = vmatpush1.msra.mxu0 0.0
    %250 = vmatprep.subr.mxu0 0.0
    %251 = vmatpush1.msra.mxu0 0.0
    %252 = vmatprep.subr.mxu0 0.0
    %253 = vmatpush1.msra.mxu0 0.0
    %254 = vmatprep.subr.mxu0 0.0
    %255 = vmatpush1.msra.mxu0 0.0
    %256 = vmatprep.subr.mxu0 0.0
    %257 = vmatpush1.msra.mxu0 0.0
    %258 = vmatprep.mubr.f32.mxu0 0.0
    %259 = vmatmul.mubr.f32.gmra.mrb[0].mxu0 %v192
    %v260 = vpop.f32.mrb[0].mxu0
    %v261 = vadd.f32 %v188, %v260
    %v262 = vpop.f32.mrb[0].mxu0
    %263 = vdwg.mxu0
    %v264 = vmax.f32 %v261, 0.0
    %v265 = vld [vmem:[%s6] sm:$0xff]
    %v266 = vld [vmem:[%s6 + $0x8] sm:$0xff]
    %v267 = vld [vmem:[%s7] sm:$0x1]
    %v269 = vlaneseq
    %v270 = vshrl.u32 %v269, 7
    %v271 = vsub.s32 0, %v270
    %v272 = vrot.slane %v267, %v271
    %v275 = vsel %vm190, %v264, 0
    %277 = vmatprep.subr.mxu0 0.0
    %278 = vmatpush1.msra.mxu0 %v265
    %279 = vmatprep.subr.mxu0 0.0
    %280 = vmatpush1.msra.mxu0 %v266
    %281 = vmatprep.subr.mxu0 0.0
    %282 = vmatpush1.msra.mxu0 0.0
    %283 = vmatprep.subr.mxu0 0.0
    %284 = vmatpush1.msra.mxu0 0.0
    %285 = vmatprep.subr.mxu0 0.0
    %286 = vmatpush1.msra.mxu0 0.0
    %287 = vmatprep.subr.mxu0 0.0
    %288 = vmatpush1.msra.mxu0 0.0
    %289 = vmatprep.subr.mxu0 0.0
    %290 = vmatpush1.msra.mxu0 0.0
    %291 = vmatprep.subr.mxu0 0.0
    %292 = vmatpush1.msra.mxu0 0.0
    %293 = vmatprep.subr.mxu0 0.0
    %294 = vmatpush1.msra.mxu0 0.0
    %295 = vmatprep.subr.mxu0 0.0
    %296 = vmatpush1.msra.mxu0 0.0
    %297 = vmatprep.subr.mxu0 0.0
    %298 = vmatpush1.msra.mxu0 0.0
    %299 = vmatprep.subr.mxu0 0.0
    %300 = vmatpush1.msra.mxu0 0.0
    %301 = vmatprep.subr.mxu0 0.0
    %302 = vmatpush1.msra.mxu0 0.0
    %303 = vmatprep.subr.mxu0 0.0
    %304 = vmatpush1.msra.mxu0 0.0
    %305 = vmatprep.subr.mxu0 0.0
    %306 = vmatpush1.msra.mxu0 0.0
    %307 = vmatprep.subr.mxu0 0.0
    %308 = vmatpush1.msra.mxu0 0.0
    %309 = vmatprep.subr.mxu0 0.0
    %310 = vmatpush1.msra.mxu0 0.0
    %311 = vmatprep.subr.mxu0 0.0
    %312 = vmatpush1.msra.mxu0 0.0
    %313 = vmatprep.subr.mxu0 0.0
    %314 = vmatpush1.msra.mxu0 0.0
    %315 = vmatprep.subr.mxu0 0.0
    %316 = vmatpush1.msra.mxu0 0.0
    %317 = vmatprep.subr.mxu0 0.0
    %318 = vmatpush1.msra.mxu0 0.0
    %319 = vmatprep.subr.mxu0 0.0
    %320 = vmatpush1.msra.mxu0 0.0
    %321 = vmatprep.subr.mxu0 0.0
    %322 = vmatpush1.msra.mxu0 0.0
    %323 = vmatprep.subr.mxu0 0.0
    %324 = vmatpush1.msra.mxu0 0.0
    %325 = vmatprep.subr.mxu0 0.0
    %326 = vmatpush1.msra.mxu0 0.0
    %327 = vmatprep.subr.mxu0 0.0
    %328 = vmatpush1.msra.mxu0 0.0
    %329 = vmatprep.subr.mxu0 0.0
    %330 = vmatpush1.msra.mxu0 0.0
    %331 = vmatprep.subr.mxu0 0.0
    %332 = vmatpush1.msra.mxu0 0.0
    %333 = vmatprep.subr.mxu0 0.0
    %334 = vmatpush1.msra.mxu0 0.0
    %335 = vmatprep.subr.mxu0 0.0
    %336 = vmatpush1.msra.mxu0 0.0
    %337 = vmatprep.subr.mxu0 0.0
    %338 = vmatpush1.msra.mxu0 0.0
    %339 = vmatprep.subr.mxu0 0.0
    %340 = vmatpush1.msra.mxu0 0.0
    %341 = vmatprep.mubr.f32.mxu0 0.0
    %342 = vmatmul.mubr.f32.gmra.mrb[0].mxu0 %v275
    %v343 = vpop.f32.mrb[0].mxu0
    %v344 = vadd.f32 %v272, %v343
    %v345 = vpop.f32.mrb[0].mxu0
    %346 = vdwg.mxu0
    %vm347 = vcmask 195584
    %348 = vst.msk [vmem:[#allocation10] sm:$0xff] %vm347, %v344
    %349 = vst.msk [vmem:[#allocation11] sm:$0xff] %vm190, %v168
    %351 = vrot.lane.b32.xlu0 %v168, 112
    %v352 = vpop.permute.xlu0 %351
    %354 = vst.msk [vmem:[#allocation13] sm:$0xff] %vm190, %v352
    // Predicated region
    $region50: #{tpu_custom_call.1} parent=1 // pred_check
      _
    $region51: #{tpu_custom_call.1} parent=1 // pred_check_branch
      %356 = sbr.rel (0) target = $region53
    $region52: #{tpu_custom_call.1} parent=1 // pred_region
      %s358 = ssub.s32 128, 128
      %359 = vsyncadd [#allocation4], %s358
      %s361 = sshll.u32 [#allocation10], 4
      %s362 = int_to_ptr.vmem [resolvable:$true] %s361
      %364 = dma.vmem_to_hbm [thread:$0]  %s362, 128, %s8, [#allocation4]
    $region53: #{tpu_custom_call.1} parent=1 // pred_fallthru
      _
    // Predicated region
    $region54: #{tpu_custom_call.1} parent=1 // pred_check
      _
    $region55: #{tpu_custom_call.1} parent=1 // pred_check_branch
      %366 = sbr.rel (0) target = $region57
    $region56: #{tpu_custom_call.1} parent=1 // pred_region
      %s368 = ssub.s32 128, 128
      %369 = vsyncadd [#allocation12], %s368
      %s371 = sshll.u32 [#allocation11], 4
      %s372 = int_to_ptr.vmem [resolvable:$true] %s371
      %374 = dma.vmem_to_hbm [thread:$0]  %s372, 128, %s9, [#allocation12]
    $region57: #{tpu_custom_call.1} parent=1 // pred_fallthru
      _
    // Predicated region
    $region58: #{tpu_custom_call.1} parent=1 // pred_check
      _
    $region59: #{tpu_custom_call.1} parent=1 // pred_check_branch
      %376 = sbr.rel (0) target = $region61
    $region60: #{tpu_custom_call.1} parent=1 // pred_region
      %s378 = ssub.s32 128, 128
      %379 = vsyncadd [#allocation12], %s378
      %s381 = sshll.u32 [#allocation13], 4
      %s382 = int_to_ptr.vmem [resolvable:$true] %s381
      %384 = dma.vmem_to_hbm [thread:$0]  %s382, 128, %s10, [#allocation12]
    $region61: #{tpu_custom_call.1} parent=1 // pred_fallthru
      _
    // Predicated region
    $region62: #{tpu_custom_call.1} parent=1 // pred_check
      _
    $region63: #{tpu_custom_call.1} parent=1 // pred_check_branch
      %386 = sbr.rel (0) target = $region65
    $region64: #{tpu_custom_call.1} parent=1 // pred_region
      %387 = dma.done [#allocation4], 128
    $region65: #{tpu_custom_call.1} parent=1 // pred_fallthru
      _
    // Predicated region
    $region66: #{tpu_custom_call.1} parent=1 // pred_check
      _
    $region67: #{tpu_custom_call.1} parent=1 // pred_check_branch
      %389 = sbr.rel (0) target = $region69
    $region68: #{tpu_custom_call.1} parent=1 // pred_region
      %390 = dma.done [#allocation12], 128
    $region69: #{tpu_custom_call.1} parent=1 // pred_fallthru
      _
    // Predicated region
    $region70: #{tpu_custom_call.1} parent=1 // pred_check
      _
    $region71: #{tpu_custom_call.1} parent=1 // pred_check_branch
      %392 = sbr.rel (0) target = $region73
    $region72: #{tpu_custom_call.1} parent=1 // pred_region
      %393 = dma.done [#allocation12], 128
    $region73: #{tpu_custom_call.1} parent=1 // pred_fallthru
      _
    %394 = vsyncpa [#allocation3], 1
    %395 = vsyncpa [#allocation6], 1
    %396 = vsyncpa [#allocation9], 1
    %397 = vsyncpa [#allocation4], 1
    %398 = vsyncpa [#allocation12], 1

</llo_original>
